<compile_context>
chip_gen: v6e
topology: v6e:2x2x1
jax: 0.10.0
libtpu: 0.0.40
codegen_flags: <defaults>
</compile_context>

<pallas_src>
import math

import jax
import jax.numpy as jnp
from jax import lax
from jax.experimental import pallas as pl
from jax.experimental.pallas import tpu as pltpu


# ---------------------------------------------------------------------------
# Kernels
# ---------------------------------------------------------------------------

def _attention_kernel_packed(x_ref, w1t_ref, b1_ref, w2t_ref, b2_ref, out_ref):
    """Small-L path: whole (L, L) attention per batch, lane-packed output."""
    blk, seq, cin = x_ref.shape

    # --- MLP (Conv1d k=1 == per-position matmul), fused over the batch block ---
    x2 = x_ref[...].reshape(blk * seq, cin)                        # bf16 (B*L, Cin)
    h = jnp.dot(x2, w1t_ref[...], preferred_element_type=jnp.float32)
    h = jnp.maximum(h + b1_ref[...], 0.0)                          # bias + ReLU (f32)
    fa = jnp.dot(h.astype(jnp.bfloat16), w2t_ref[...],
                 preferred_element_type=jnp.float32)
    fa = (fa + b2_ref[...]).astype(jnp.bfloat16)                   # bf16 for the MXU

    # --- attention logits: fa @ fa^T per batch (bf16 in, f32 acc) ---
    fa3 = fa.reshape(blk, seq, cin)
    logits = lax.dot_general(
        fa3, fa3,
        dimension_numbers=(((2,), (2,)), ((0,), (0,))),
        preferred_element_type=jnp.float32)                        # (B, L, L)

    # --- numerically stable softmax over the last dim (f32) ---
    m = jnp.max(logits, axis=-1, keepdims=True)
    e = jnp.exp(logits - m)
    denom = jnp.sum(e, axis=-1, keepdims=True)
    attn = e * pl.reciprocal(denom, approx=True)                   # EUP reciprocal

    # --- lane-dense store: fold batch into the lane axis with ONE relayout ---
    out_ref[...] = jnp.swapaxes(attn, 0, 1).reshape(seq, blk * seq).astype(out_ref.dtype)


def _attention_kernel_direct(x_ref, w1t_ref, b1_ref, w2t_ref, b2_ref,
                             out_ref, fa_ref):
    """Large-L path (seq % 128 == 0): direct (b_blk, tq, L) output blocks.

    Grid = (batch_blocks, query_tiles); the query axis is sequential
    ("arbitrary"), and the MLP result `fa` is computed once per batch block
    (at q == 0) into a VMEM scratch and reused for every query tile.
    """
    blk, seq, cin = x_ref.shape
    tq = out_ref.shape[1]

    @pl.when(pl.program_id(1) == 0)
    def _():
        x2 = x_ref[...].reshape(blk * seq, cin)
        h = jnp.dot(x2, w1t_ref[...], preferred_element_type=jnp.float32)
        h = jnp.maximum(h + b1_ref[...], 0.0)
        fa = jnp.dot(h.astype(jnp.bfloat16), w2t_ref[...],
                     preferred_element_type=jnp.float32)
        fa = fa + b2_ref[...]
        fa_ref[...] = fa.reshape(blk, seq, cin).astype(jnp.bfloat16)

    qi = pl.program_id(1)
    q0 = pl.multiple_of(qi * tq, tq)
    fa_q = fa_ref[:, pl.ds(q0, tq), :]                             # (B, tq, Cin) bf16
    fa_k = fa_ref[...]                                             # (B, L,  Cin) bf16
    logits = lax.dot_general(
        fa_q, fa_k,
        dimension_numbers=(((2,), (2,)), ((0,), (0,))),
        preferred_element_type=jnp.float32)                        # (B, tq, L)

    m = jnp.max(logits, axis=-1, keepdims=True)
    e = jnp.exp(logits - m)
    denom = jnp.sum(e, axis=-1, keepdims=True)
    out_ref[...] = (e * pl.reciprocal(denom, approx=True)).astype(out_ref.dtype)


# ---------------------------------------------------------------------------
# Wrapper
# ---------------------------------------------------------------------------

def _vmem_capacity_bytes():
    try:
        return int(pltpu.get_tpu_info().vmem_capacity_bytes)
    except Exception:
        return 64 << 20  # conservative fallback (v7x-sized)


def _choose_block_batches(n, seq, cin, hid, direct_out, vmem_cap_bytes):
    """How many batch elements each grid step processes (VMEM-aware)."""
    budget = vmem_cap_bytes // 2           # leave room for double-buffering slack
    lane = lambda c: ((c + 127) // 128) * 128
    # Rough per-batch-element VMEM footprint: bf16 input (double-buffered,
    # lane-padded), f32 h/fa intermediates, f32 logits/e/attn + out block.
    per_batch = seq * (
        4 * lane(cin) * 2                  # input tile, bf16, 2 buffers
        + 4 * (lane(hid) + lane(cin))      # h + fa
        + 5 * seq * 4)                     # logits, e, attn, 2x out block
    fit = max(1, budget // max(per_batch, 1))

    # Bigger blocks on 128 MiB-VMEM parts (v5e/v6e), smaller on v7x (64 MiB).
    target_rows = 512 if vmem_cap_bytes >= (96 << 20) else 256

    if direct_out:
        b_blk = max(1, min(n, max(1, target_rows // seq), fit))
        if n > 1:
            # Keep >= 2 grid steps so v7x can shard the batch axis over 2 TCs.
            b_blk = min(b_blk, -(-n // 2))
        return b_blk

    # Lane-packed output path: whole batch in one block if it is small, else
    # (b_blk * seq) must be a multiple of 128 so the output block is aligned.
    if n * seq <= max(128, target_rows) and n <= fit:
        return n
    unit = 128 // math.gcd(seq, 128)
    b_blk = unit * max(1, min(max(1, target_rows // (unit * seq)), fit // unit))
    b_blk = min(b_blk, unit * (-(-n // unit)))   # don't overshoot the padded batch
    return b_blk


def attention_forward(features, w1, b1, w2, b2, *, block_batches=None,
                      query_tile=None):
    """features: (N, L, Cin); w1: (H, Cin); b1: (H,); w2: (Cin, H); b2: (Cin,)."""
    n, seq, cin = features.shape
    hid = w1.shape[0]

    # bf16 operands for the MXU (halves activation/weight DMA); f32 biases.
    xb = jnp.asarray(features, jnp.bfloat16)
    w1t = jnp.asarray(w1, jnp.bfloat16).T                 # (Cin, H)
    w2t = jnp.asarray(w2, jnp.bfloat16).T                 # (H, Cin)
    b1_2d = jnp.asarray(b1, jnp.float32).reshape(1, hid)
    b2_2d = jnp.asarray(b2, jnp.float32).reshape(1, cin)

    direct = (seq % 128 == 0)
    vmem_cap = _vmem_capacity_bytes()

    b_blk = (block_batches if block_batches is not None
             else _choose_block_batches(n, seq, cin, hid, direct, vmem_cap))
    n_blocks = -(-n // b_blk)
    n_pad = n_blocks * b_blk
    if n_pad != n:
        xb = jnp.pad(xb, ((0, n_pad - n), (0, 0), (0, 0)))

    vmem_limit = int(min(vmem_cap * 3 // 4, 128 << 20))

    flops = 4 * n_pad * seq * cin * hid + 2 * n_pad * seq * seq * cin
    cost = pl.CostEstimate(
        flops=int(flops),
        transcendentals=int(n_pad * seq * seq),
        bytes_accessed=int(n_pad * seq * cin * 2
                           + (2 * cin * hid + cin + hid) * 2
                           + n_pad * seq * seq * 4))

    weight_specs = [
        pl.BlockSpec((cin, hid), lambda *_: (0, 0)),      # W1^T
        pl.BlockSpec((1, hid), lambda *_: (0, 0)),        # b1
        pl.BlockSpec((hid, cin), lambda *_: (0, 0)),      # W2^T
        pl.BlockSpec((1, cin), lambda *_: (0, 0)),        # b2
    ]

    if direct:
        # Query-tile the (L, L) softmax so logits/e stay O(tq * L) in VMEM.
        tq = query_tile if query_tile is not None else min(seq, 256)
        while seq % tq != 0:
            tq -= 128
        tq = max(tq, 128)
        q_tiles = seq // tq

        attn = pl.pallas_call(
            _attention_kernel_direct,
            out_shape=jax.ShapeDtypeStruct((n_pad, seq, seq), jnp.float32),
            grid=(n_blocks, q_tiles),
            in_specs=[pl.BlockSpec((b_blk, seq, cin), lambda b, q: (b, 0, 0))]
                     + weight_specs,
            out_specs=pl.BlockSpec((b_blk, tq, seq), lambda b, q: (b, q, 0)),
            scratch_shapes=[pltpu.VMEM((b_blk, seq, cin), jnp.bfloat16)],
            compiler_params=pltpu.CompilerParams(
                dimension_semantics=("parallel", "arbitrary"),
                vmem_limit_bytes=vmem_limit),
            cost_estimate=cost,
        )(xb, w1t, b1_2d, w2t, b2_2d)
        return attn[:n]

    out2d = pl.pallas_call(
        _attention_kernel_packed,
        out_shape=jax.ShapeDtypeStruct((seq, n_pad * seq), jnp.float32),
        grid=(n_blocks,),
        in_specs=[pl.BlockSpec((b_blk, seq, cin), lambda b: (b, 0, 0))]
                 + weight_specs,
        out_specs=pl.BlockSpec((seq, b_blk * seq), lambda b: (0, b)),
        compiler_params=pltpu.CompilerParams(
            dimension_semantics=("parallel",),
            vmem_limit_bytes=vmem_limit),
        cost_estimate=cost,
    )(xb, w1t, b1_2d, w2t, b2_2d)

    # Unfold the lane-packed layout: (L, n_pad*L) -> (n_pad, L, L) -> (N, L, L).
    attn = out2d.reshape(seq, n_pad, seq).transpose(1, 0, 2)
    return attn[:n]


# ---------------------------------------------------------------------------
# Reference (matches the kernel's bf16-in / f32-accumulate numerics)
# ---------------------------------------------------------------------------

def attention_reference(features, w1, b1, w2, b2):
    xb = jnp.asarray(features, jnp.bfloat16)
    w1b = jnp.asarray(w1, jnp.bfloat16)
    w2b = jnp.asarray(w2, jnp.bfloat16)
    h = jnp.einsum("nlc,hc->nlh", xb, w1b, preferred_element_type=jnp.float32)
    h = jnp.maximum(h + jnp.asarray(b1, jnp.float32), 0.0)
    fa = jnp.einsum("nlh,ch->nlc", h.astype(jnp.bfloat16), w2b,
                    preferred_element_type=jnp.float32)
    fa = (fa + jnp.asarray(b2, jnp.float32)).astype(jnp.bfloat16)
    logits = jnp.einsum("nic,njc->nij", fa, fa, preferred_element_type=jnp.float32)
    return jax.nn.softmax(logits, axis=-1)


if __name__ == "__main__":
    key = jax.random.PRNGKey(0)
    n, seq = 2, 8
    in_features, hidden_features = 32, 32

    k_x, k_w1, k_b1, k_w2, k_b2 = jax.random.split(key, 5)
    features = jax.random.normal(k_x, (n, seq, in_features), jnp.float32)

    # Conv1d(kernel_size=1) weights, squeezed: (out_channels, in_channels).
    w1 = jax.random.normal(k_w1, (hidden_features, in_features), jnp.float32) * 0.1
    b1 = jax.random.normal(k_b1, (hidden_features,), jnp.float32) * 0.1
    w2 = jax.random.normal(k_w2, (in_features, hidden_features), jnp.float32) * 0.1
    b2 = jax.random.normal(k_b2, (in_features,), jnp.float32) * 0.1

    out = attention_forward(features, w1, b1, w2, b2)
    out = jax.block_until_ready(out)

    ref = attention_reference(features, w1, b1, w2, b2)
    assert out.shape == (n, seq, seq)
    assert jnp.allclose(out, ref, atol=3e-3, rtol=3e-3), (
        f"mismatch vs reference, max abs err = {jnp.max(jnp.abs(out - ref))}")

    print("KERNEL_OK")
</pallas_src>

<mosaic_0001>
module attributes {stable_mosaic.version = 11 : i64} {
  func.func @_attention_kernel_packed(%arg0: i32, %arg1: memref<2x8x32xbf16, #tpu.memory_space<vmem>>, %arg2: memref<32x32xbf16, #tpu.memory_space<vmem>>, %arg3: memref<1x32xf32, #tpu.memory_space<vmem>>, %arg4: memref<32x32xbf16, #tpu.memory_space<vmem>>, %arg5: memref<1x32xf32, #tpu.memory_space<vmem>>, %arg6: memref<8x16xf32, #tpu.memory_space<vmem>>) attributes {dimension_semantics = [#tpu.dimension_semantics<parallel>], iteration_bounds = array<i64: 1>, scalar_prefetch = 0 : i64, scratch_operands = 0 : i64, tpu.core_type = #tpu.core_type<tc>, window_params = [{transform_indices = @transform_0, window_bounds = array<i64: 2, 8, 32>}, {pipeline_mode = #tpu.pipeline_mode<synchronous>, transform_indices = @transform_1, window_bounds = array<i64: 32, 32>}, {pipeline_mode = #tpu.pipeline_mode<synchronous>, transform_indices = @transform_2, window_bounds = array<i64: 1, 32>}, {pipeline_mode = #tpu.pipeline_mode<synchronous>, transform_indices = @transform_3, window_bounds = array<i64: 32, 32>}, {pipeline_mode = #tpu.pipeline_mode<synchronous>, transform_indices = @transform_4, window_bounds = array<i64: 1, 32>}, {transform_indices = @transform_5, window_bounds = array<i64: 8, 16>}]} {
    %c0 = arith.constant 0 : index
    %c0_0 = arith.constant 0 : index
    %c0_1 = arith.constant 0 : index
    %0 = vector.load %arg1[%c0, %c0_0, %c0_1] : memref<2x8x32xbf16, #tpu.memory_space<vmem>>, vector<2x8x32xbf16>
    %1 = vector.shape_cast %0 : vector<2x8x32xbf16> to vector<16x32xbf16>
    %c0_2 = arith.constant 0 : index
    %c0_3 = arith.constant 0 : index
    %2 = vector.load %arg2[%c0_2, %c0_3] : memref<32x32xbf16, #tpu.memory_space<vmem>>, vector<32x32xbf16>
    %cst = arith.constant dense<0.000000e+00> : vector<16x32xf32>
    %3 = tpu.matmul %1, %2, %cst {dimension_numbers = #tpu.dot_dimension_numbers<[1], [0], [0], [1], [0, 0, 1, 1], [], []>} : vector<16x32xbf16>, vector<32x32xbf16>, vector<16x32xf32> -> vector<16x32xf32>
    %c0_4 = arith.constant 0 : index
    %c0_5 = arith.constant 0 : index
    %4 = vector.load %arg3[%c0_4, %c0_5] : memref<1x32xf32, #tpu.memory_space<vmem>>, vector<1x32xf32>
    %5 = vector.broadcast %4 : vector<1x32xf32> to vector<16x32xf32>
    %6 = arith.addf %3, %5 : vector<16x32xf32>
    %cst_6 = arith.constant 0.000000e+00 : f32
    %7 = vector.broadcast %cst_6 : f32 to vector<16x32xf32>
    %8 = arith.maximumf %6, %7 : vector<16x32xf32>
    %9 = arith.truncf %8 : vector<16x32xf32> to vector<16x32xbf16>
    %c0_7 = arith.constant 0 : index
    %c0_8 = arith.constant 0 : index
    %10 = vector.load %arg4[%c0_7, %c0_8] : memref<32x32xbf16, #tpu.memory_space<vmem>>, vector<32x32xbf16>
    %cst_9 = arith.constant dense<0.000000e+00> : vector<16x32xf32>
    %11 = tpu.matmul %9, %10, %cst_9 {dimension_numbers = #tpu.dot_dimension_numbers<[1], [0], [0], [1], [0, 0, 1, 1], [], []>} : vector<16x32xbf16>, vector<32x32xbf16>, vector<16x32xf32> -> vector<16x32xf32>
    %c0_10 = arith.constant 0 : index
    %c0_11 = arith.constant 0 : index
    %12 = vector.load %arg5[%c0_10, %c0_11] : memref<1x32xf32, #tpu.memory_space<vmem>>, vector<1x32xf32>
    %13 = vector.broadcast %12 : vector<1x32xf32> to vector<16x32xf32>
    %14 = arith.addf %11, %13 : vector<16x32xf32>
    %15 = arith.truncf %14 : vector<16x32xf32> to vector<16x32xbf16>
    %16 = vector.shape_cast %15 : vector<16x32xbf16> to vector<2x8x32xbf16>
    %cst_12 = arith.constant dense<0.000000e+00> : vector<2x8x8xf32>
    %17 = tpu.matmul %16, %16, %cst_12 {dimension_numbers = #tpu.dot_dimension_numbers<[2], [2], [1], [1], [0, 0, 0, 1, 1, 1], [0], [0]>} : vector<2x8x32xbf16>, vector<2x8x32xbf16>, vector<2x8x8xf32> -> vector<2x8x8xf32>
    %cst_13 = arith.constant dense<0xFF800000> : vector<2x8xf32>
    %18 = vector.multi_reduction <maximumf>, %17, %cst_13 [2] : vector<2x8x8xf32> to vector<2x8xf32>
    %19 = vector.shape_cast %18 : vector<2x8xf32> to vector<2x8x1xf32>
    %20 = vector.broadcast %19 : vector<2x8x1xf32> to vector<2x8x8xf32>
    %21 = arith.subf %17, %20 : vector<2x8x8xf32>
    %22 = math.exp %21 : vector<2x8x8xf32>
    %cst_14 = arith.constant dense<0.000000e+00> : vector<2x8xf32>
    %23 = vector.multi_reduction <add>, %22, %cst_14 [2] : vector<2x8x8xf32> to vector<2x8xf32>
    %24 = vector.shape_cast %23 : vector<2x8xf32> to vector<2x8x1xf32>
    %25 = tpu.reciprocal %24 {approx = true} : vector<2x8x1xf32> -> vector<2x8x1xf32>
    %26 = vector.broadcast %25 : vector<2x8x1xf32> to vector<2x8x8xf32>
    %27 = arith.mulf %22, %26 : vector<2x8x8xf32>
    %28 = tpu.transpose %27, [1, 0, 2] : vector<2x8x8xf32> -> vector<8x2x8xf32>
    %29 = vector.shape_cast %28 : vector<8x2x8xf32> to vector<8x16xf32>
    %c0_15 = arith.constant 0 : index
    %c0_16 = arith.constant 0 : index
    %30 = vector.load %arg6[%c0_15, %c0_16] : memref<8x16xf32, #tpu.memory_space<vmem>>, vector<8x16xf32>
    tpu.vector_store %arg6[%c0_15, %c0_16], %29 {strides = array<i32>} : memref<8x16xf32, #tpu.memory_space<vmem>>, vector<8x16xf32>,
    return
  }
  func.func @transform_0(%arg0: i32) -> (i32, i32, i32) {
    %c0_i32 = arith.constant 0 : i32
    %c0_i32_0 = arith.constant 0 : i32
    %c0_i32_1 = arith.constant 0 : i32
    return %arg0, %c0_i32, %c0_i32_0 : i32, i32, i32
  }
  func.func @transform_1(%arg0: i32) -> (i32, i32) {
    %c0_i32 = arith.constant 0 : i32
    %c0_i32_0 = arith.constant 0 : i32
    %c0_i32_1 = arith.constant 0 : i32
    return %c0_i32, %c0_i32_0 : i32, i32
  }
  func.func @transform_2(%arg0: i32) -> (i32, i32) {
    %c0_i32 = arith.constant 0 : i32
    %c0_i32_0 = arith.constant 0 : i32
    %c0_i32_1 = arith.constant 0 : i32
    return %c0_i32, %c0_i32_0 : i32, i32
  }
  func.func @transform_3(%arg0: i32) -> (i32, i32) {
    %c0_i32 = arith.constant 0 : i32
    %c0_i32_0 = arith.constant 0 : i32
    %c0_i32_1 = arith.constant 0 : i32
    return %c0_i32, %c0_i32_0 : i32, i32
  }
  func.func @transform_4(%arg0: i32) -> (i32, i32) {
    %c0_i32 = arith.constant 0 : i32
    %c0_i32_0 = arith.constant 0 : i32
    %c0_i32_1 = arith.constant 0 : i32
    return %c0_i32, %c0_i32_0 : i32, i32
  }
  func.func @transform_5(%arg0: i32) -> (i32, i32) {
    %c0_i32 = arith.constant 0 : i32
    %c0_i32_0 = arith.constant 0 : i32
    return %c0_i32, %arg0 : i32, i32
  }
}

</mosaic_0001>

<llo_original>
// kernel: tpu_custom_call.1
$region0: #{tpu_custom_call.1}
  #allocation0 [shape = 'u32[]', space=smem, size = 0x4, offset = 0x4, fixed_abs, tag = 'smem constant byte address 0x4 - core index']
  #allocation1 [shape = 'u32[144,128]{1,0:T(1,128)}', space=vmem, size = 0x12000, scoped, tag = 'internal scratch']
  %s0 = inlined_call_operand.hbm [shape: bf16[2,8,32], index: 0, kind: input, shape index: {}]
  %s1 = inlined_call_operand.hbm [shape: bf16[32,32], index: 1, kind: input, shape index: {}]
  %s2 = inlined_call_operand.vmem [shape: f32[1,32], index: 2, kind: input, shape index: {}]
  %s3 = inlined_call_operand.hbm [shape: bf16[32,32], index: 3, kind: input, shape index: {}]
  %s4 = inlined_call_operand.vmem [shape: f32[1,32], index: 4, kind: input, shape index: {}]
  %s5 = inlined_call_operand.hbm [shape: f32[8,16], index: 5, kind: output, shape index: {}]
  %s6 = sld [smem:[#allocation0]]
  $region42: #{tpu_custom_call.1} parent=0
    _
  %s8 = ssub.s32 1, %s6
  %s9 = scalar_select 0, %s8, %s6
  $region1: #{tpu_custom_call.1} parent=0
    #allocation2 [shape = 'u8[4096]{0}', space=vmem, size = 0x1000, scoped, tag = 'input window, operand 0, single buffered']
    #allocation3 [shape = 's32[1]{0}', space=sflag, size = 0x4, scoped, tag = 'scoped memory for tpu_custom_call.1']
    #allocation4 [shape = 's32[1]{0}', space=sflag, size = 0x4, scoped, tag = 'scoped memory for tpu_custom_call.1']
    #allocation5 [shape = 'u8[8192]{0}', space=vmem, size = 0x2000, scoped, tag = 'input window, operand 1, single buffered']
    #allocation6 [shape = 's32[1]{0}', space=sflag, size = 0x4, scoped, tag = 'scoped memory for tpu_custom_call.1']
    #allocation7 [shape = 'u8[8192]{0}', space=vmem, size = 0x2000, scoped, tag = 'input window, operand 3, single buffered']
    #allocation8 [shape = 'u8[4096]{0}', space=vmem, size = 0x1000, scoped, tag = 'output window, operand 0, single buffered']
    %10 = vsyncpa [#allocation3], 0
    %11 = vsyncpa [#allocation6], 0
    %12 = vsyncpa [#allocation4], 0
    // Predicated region
    $region2: #{tpu_custom_call.1} parent=1 // pred_check
      _
    $region3: #{tpu_custom_call.1} parent=1 // pred_check_branch
      %14 = sbr.rel (0) target = $region5
    $region4: #{tpu_custom_call.1} parent=1 // pred_region
      %s16 = ssub.s32 128, 128
      %17 = vsyncadd [#allocation3], %s16
      %s18 = sshll.u32 [#allocation2], 4
      %s19 = int_to_ptr.vmem [resolvable:$true] %s18
      %24 = dma.hbm_to_vmem [thread:$0]  %s0, 128, %s19, [#allocation3], 64, 64, 4
    $region5: #{tpu_custom_call.1} parent=1 // pred_fallthru
      _
    // Predicated region
    $region6: #{tpu_custom_call.1} parent=1 // pred_check
      _
    $region7: #{tpu_custom_call.1} parent=1 // pred_check_branch
      %26 = sbr.rel (0) target = $region9
    $region8: #{tpu_custom_call.1} parent=1 // pred_region
      %s28 = ssub.s32 256, 256
      %29 = vsyncadd [#allocation6], %s28
      %s30 = sshll.u32 [#allocation5], 4
      %s31 = int_to_ptr.vmem [resolvable:$true] %s30
      %36 = dma.hbm_to_vmem [thread:$0]  %s1, 256, %s31, [#allocation6], 64, 64, 4
    $region9: #{tpu_custom_call.1} parent=1 // pred_fallthru
      _
    // Predicated region
    $region10: #{tpu_custom_call.1} parent=1 // pred_check
      _
    $region11: #{tpu_custom_call.1} parent=1 // pred_check_branch
      %38 = sbr.rel (0) target = $region13
    $region12: #{tpu_custom_call.1} parent=1 // pred_region
      _
    $region13: #{tpu_custom_call.1} parent=1 // pred_fallthru
      _
    // Predicated region
    $region14: #{tpu_custom_call.1} parent=1 // pred_check
      _
    $region15: #{tpu_custom_call.1} parent=1 // pred_check_branch
      %40 = sbr.rel (0) target = $region17
    $region16: #{tpu_custom_call.1} parent=1 // pred_region
      %s42 = ssub.s32 256, 256
      %43 = vsyncadd [#allocation6], %s42
      %s44 = sshll.u32 [#allocation7], 4
      %s45 = int_to_ptr.vmem [resolvable:$true] %s44
      %50 = dma.hbm_to_vmem [thread:$0]  %s3, 256, %s45, [#allocation6], 64, 64, 4
    $region17: #{tpu_custom_call.1} parent=1 // pred_fallthru
      _
    // Predicated region
    $region18: #{tpu_custom_call.1} parent=1 // pred_check
      _
    $region19: #{tpu_custom_call.1} parent=1 // pred_check_branch
      %52 = sbr.rel (0) target = $region21
    $region20: #{tpu_custom_call.1} parent=1 // pred_region
      _
    $region21: #{tpu_custom_call.1} parent=1 // pred_fallthru
      _
    // Predicated region
    $region22: #{tpu_custom_call.1} parent=1 // pred_check
      _
    $region23: #{tpu_custom_call.1} parent=1 // pred_check_branch
      %54 = sbr.rel (0) target = $region25
    $region24: #{tpu_custom_call.1} parent=1 // pred_region
      %55 = dma.done [#allocation3], 128
    $region25: #{tpu_custom_call.1} parent=1 // pred_fallthru
      _
    // Predicated region
    $region26: #{tpu_custom_call.1} parent=1 // pred_check
      _
    $region27: #{tpu_custom_call.1} parent=1 // pred_check_branch
      %57 = sbr.rel (0) target = $region29
    $region28: #{tpu_custom_call.1} parent=1 // pred_region
      %58 = dma.done [#allocation6], 256
    $region29: #{tpu_custom_call.1} parent=1 // pred_fallthru
      _
    // Predicated region
    $region30: #{tpu_custom_call.1} parent=1 // pred_check
      _
    $region31: #{tpu_custom_call.1} parent=1 // pred_check_branch
      %60 = sbr.rel (0) target = $region33
    $region32: #{tpu_custom_call.1} parent=1 // pred_region
      %61 = dma.done [#allocation6], 256
    $region33: #{tpu_custom_call.1} parent=1 // pred_fallthru
      _
    %v63 = vld [vmem:[#allocation2] sm:$0xf]
    %v64 = vld [vmem:[#allocation2 + $0x4] sm:$0xf]
    %v65 = vld [vmem:[#allocation5] sm:$0xf]
    %v66 = vld [vmem:[#allocation5 + $0x4] sm:$0xf]
    %v67 = vld [vmem:[#allocation5 + $0x8] sm:$0xf]
    %v68 = vld [vmem:[#allocation5 + $0xc] sm:$0xf]
    %v69 = vld [vmem:[%s2] sm:$0x1]
    %v71 = vlaneseq
    %v72 = vshrl.u32 %v71, 7
    %v73 = vsub.s32 0, %v72
    %v74 = vrot.slane %v69, %v73
    %v78 = vunpack.c.l.b16 %v63
    %v79 = vunpack.c.l.b16 %v64
    %v80 = vpack.c.b16 %v79, %v78
    %v85 = vunpack.c.l.b16 %v65
    %v86 = vunpack.c.l.b16 %v66
    %v87 = vunpack.c.l.b16 %v67
    %v88 = vunpack.c.l.b16 %v68
    %v89 = vpack.c.b16 %v86, %v85
    %v90 = vpack.c.b16 %v88, %v87
    %vm93 = vcmask 261120
    %v95 = vsel %vm93, %v80, 0
    %97 = vmatprep.subr.bf16.mxu0 0
    %98 = vmatpush1.bf16.msra.mxu0 0
    %99 = vmatprep.subr.bf16.mxu0 0
    %100 = vmatpush1.bf16.msra.mxu0 0
    %101 = vmatprep.subr.bf16.mxu0 0
    %102 = vmatpush1.bf16.msra.mxu0 0
    %103 = vmatprep.subr.bf16.mxu0 0
    %104 = vmatpush1.bf16.msra.mxu0 0
    %105 = vmatprep.subr.bf16.mxu0 0
    %106 = vmatpush1.bf16.msra.mxu0 0
    %107 = vmatprep.subr.bf16.mxu0 0
    %108 = vmatpush1.bf16.msra.mxu0 0
    %109 = vmatprep.subr.bf16.mxu0 0
    %110 = vmatpush1.bf16.msra.mxu0 %v90
    %111 = vmatprep.subr.bf16.mxu0 0
    %112 = vmatpush1.bf16.msra.mxu0 %v89
    %113 = vmatprep.subr.bf16.mxu0 0
    %114 = vmatpush2.bf16.msra.mxu0 0
    %115 = vmatprep.subr.bf16.mxu0 0
    %116 = vmatpush2.bf16.msra.mxu0 0
    %117 = vmatprep.subr.bf16.mxu0 0
    %118 = vmatpush2.bf16.msra.mxu0 0
    %119 = vmatprep.subr.bf16.mxu0 0
    %120 = vmatpush2.bf16.msra.mxu0 0
    %121 = vmatprep.subr.bf16.mxu0 0
    %122 = vmatpush2.bf16.msra.mxu0 0
    %123 = vmatprep.subr.bf16.mxu0 0
    %124 = vmatpush2.bf16.msra.mxu0 0
    %125 = vmatprep.subr.bf16.mxu0 0
    %126 = vmatpush2.bf16.msra.mxu0 0
    %127 = vmatprep.subr.bf16.mxu0 0
    %128 = vmatpush2.bf16.msra.mxu0 0
    %129 = vmatprep.mubr.bf16.mxu0 0
    %130 = vmatmul.mubr.bf16.gmra.mxu0 %v95
    %v131 = vpop.f32.mrf.mxu0
    %v132 = vadd.f32 %v74, %v131
    %v133 = vpop.f32.mrf.mxu0
    %v134 = vpop.f32.mrf.mxu0
    %v135 = vadd.f32 %v74, %v134
    %v136 = vpop.f32.mrf.mxu0
    %137 = vdwg.mxu0
    %v138 = vmax.f32 %v132, 0.0
    %v139 = vmax.f32 %v135, 0.0
    %v140 = vpack.c.bf16 %v139, %v138
    %v141 = vld [vmem:[#allocation7] sm:$0xf]
    %v142 = vld [vmem:[#allocation7 + $0x4] sm:$0xf]
    %v143 = vld [vmem:[#allocation7 + $0x8] sm:$0xf]
    %v144 = vld [vmem:[#allocation7 + $0xc] sm:$0xf]
    %v145 = vld [vmem:[%s4] sm:$0x1]
    %v147 = vlaneseq
    %v148 = vshrl.u32 %v147, 7
    %v149 = vsub.s32 0, %v148
    %v150 = vrot.slane %v145, %v149
    %v156 = vunpack.c.l.b16 %v141
    %v157 = vunpack.c.l.b16 %v142
    %v158 = vunpack.c.l.b16 %v143
    %v159 = vunpack.c.l.b16 %v144
    %v160 = vpack.c.b16 %v157, %v156
    %v161 = vpack.c.b16 %v159, %v158
    %v165 = vsel %vm93, %v140, 0
    %167 = vmatprep.subr.bf16.mxu0 0
    %168 = vmatpush1.bf16.msra.mxu0 0
    %169 = vmatprep.subr.bf16.mxu0 0
    %170 = vmatpush1.bf16.msra.mxu0 0
    %171 = vmatprep.subr.bf16.mxu0 0
    %172 = vmatpush1.bf16.msra.mxu0 0
    %173 = vmatprep.subr.bf16.mxu0 0
    %174 = vmatpush1.bf16.msra.mxu0 0
    %175 = vmatprep.subr.bf16.mxu0 0
    %176 = vmatpush1.bf16.msra.mxu0 0
    %177 = vmatprep.subr.bf16.mxu0 0
    %178 = vmatpush1.bf16.msra.mxu0 0
    %179 = vmatprep.subr.bf16.mxu0 0
    %180 = vmatpush1.bf16.msra.mxu0 %v161
    %181 = vmatprep.subr.bf16.mxu0 0
    %182 = vmatpush1.bf16.msra.mxu0 %v160
    %183 = vmatprep.subr.bf16.mxu0 0
    %184 = vmatpush2.bf16.msra.mxu0 0
    %185 = vmatprep.subr.bf16.mxu0 0
    %186 = vmatpush2.bf16.msra.mxu0 0
    %187 = vmatprep.subr.bf16.mxu0 0
    %188 = vmatpush2.bf16.msra.mxu0 0
    %189 = vmatprep.subr.bf16.mxu0 0
    %190 = vmatpush2.bf16.msra.mxu0 0
    %191 = vmatprep.subr.bf16.mxu0 0
    %192 = vmatpush2.bf16.msra.mxu0 0
    %193 = vmatprep.subr.bf16.mxu0 0
    %194 = vmatpush2.bf16.msra.mxu0 0
    %195 = vmatprep.subr.bf16.mxu0 0
    %196 = vmatpush2.bf16.msra.mxu0 0
    %197 = vmatprep.subr.bf16.mxu0 0
    %198 = vmatpush2.bf16.msra.mxu0 0
    %199 = vmatprep.mubr.bf16.mxu0 0
    %200 = vmatmul.mubr.bf16.gmra.mxu0 %v165
    %v201 = vpop.f32.mrf.mxu0
    %v202 = vadd.f32 %v150, %v201
    %v203 = vpop.f32.mrf.mxu0
    %v204 = vpop.f32.mrf.mxu0
    %v205 = vadd.f32 %v150, %v204
    %v206 = vpop.f32.mrf.mxu0
    %207 = vdwg.mxu0
    %v208 = vpack.c.bf16 %v205, %v202
    %v210 = vunpack.c.l.b16 %v208
    %v211 = vunpack.c.h.b16 %v208
    %v212 = vpack.c.b16 %v210, %v210
    %v213 = vpack.c.b16 %v211, %v211
    %v215 = vsel %vm93, %v212, 0
    %217 = vmatprep.subr.bf16.mxu0 0
    %218 = vmatpush1.bf16.xpose.msra.mxu0 0
    %219 = vmatprep.subr.bf16.mxu0 0
    %220 = vmatpush1.bf16.xpose.msra.mxu0 0
    %221 = vmatprep.subr.bf16.mxu0 0
    %222 = vmatpush1.bf16.xpose.msra.mxu0 0
    %223 = vmatprep.subr.bf16.mxu0 0
    %224 = vmatpush1.bf16.xpose.msra.mxu0 0
    %225 = vmatprep.subr.bf16.mxu0 0
    %226 = vmatpush1.bf16.xpose.msra.mxu0 0
    %227 = vmatprep.subr.bf16.mxu0 0
    %228 = vmatpush1.bf16.xpose.msra.mxu0 0
    %229 = vmatprep.subr.bf16.mxu0 0
    %230 = vmatpush1.bf16.xpose.msra.mxu0 0
    %231 = vmatprep.subr.bf16.mxu0 0
    %232 = vmatpush1.bf16.xpose.msra.mxu0 %v215
    %233 = vmatprep.subr.bf16.mxu0 0
    %234 = vmatpush2.bf16.xpose.msra.mxu0 0
    %235 = vmatprep.subr.bf16.mxu0 0
    %236 = vmatpush2.bf16.xpose.msra.mxu0 0
    %237 = vmatprep.subr.bf16.mxu0 0
    %238 = vmatpush2.bf16.xpose.msra.mxu0 0
    %239 = vmatprep.subr.bf16.mxu0 0
    %240 = vmatpush2.bf16.xpose.msra.mxu0 0
    %241 = vmatprep.subr.bf16.mxu0 0
    %242 = vmatpush2.bf16.xpose.msra.mxu0 0
    %243 = vmatprep.subr.bf16.mxu0 0
    %244 = vmatpush2.bf16.xpose.msra.mxu0 0
    %245 = vmatprep.subr.bf16.mxu0 0
    %246 = vmatpush2.bf16.xpose.msra.mxu0 0
    %247 = vmatprep.subr.bf16.mxu0 0
    %248 = vmatpush2.bf16.xpose.msra.mxu0 0
    %249 = vmatprep.mubr.bf16.mxu0 0
    %250 = vmatmul.mubr.bf16.gmra.mxu0 %v215
    %v251 = vpop.f32.mrf.mxu0
    %v252 = vadd.f32 0.0, %v251
    %v253 = vpop.f32.mrf.mxu0
    %v254 = vpop.f32.mrf.mxu0
    %v255 = vpop.f32.mrf.mxu0
    %256 = vdwg.mxu0
    %v258 = vsel %vm93, %v213, 0
    %260 = vmatprep.subr.bf16.mxu0 0
    %261 = vmatpush1.bf16.xpose.msra.mxu0 0
    %262 = vmatprep.subr.bf16.mxu0 0
    %263 = vmatpush1.bf16.xpose.msra.mxu0 0
    %264 = vmatprep.subr.bf16.mxu0 0
    %265 = vmatpush1.bf16.xpose.msra.mxu0 0
    %266 = vmatprep.subr.bf16.mxu0 0
    %267 = vmatpush1.bf16.xpose.msra.mxu0 0
    %268 = vmatprep.subr.bf16.mxu0 0
    %269 = vmatpush1.bf16.xpose.msra.mxu0 0
    %270 = vmatprep.subr.bf16.mxu0 0
    %271 = vmatpush1.bf16.xpose.msra.mxu0 0
    %272 = vmatprep.subr.bf16.mxu0 0
    %273 = vmatpush1.bf16.xpose.msra.mxu0 0
    %274 = vmatprep.subr.bf16.mxu0 0
    %275 = vmatpush1.bf16.xpose.msra.mxu0 %v258
    %276 = vmatprep.subr.bf16.mxu0 0
    %277 = vmatpush2.bf16.xpose.msra.mxu0 0
    %278 = vmatprep.subr.bf16.mxu0 0
    %279 = vmatpush2.bf16.xpose.msra.mxu0 0
    %280 = vmatprep.subr.bf16.mxu0 0
    %281 = vmatpush2.bf16.xpose.msra.mxu0 0
    %282 = vmatprep.subr.bf16.mxu0 0
    %283 = vmatpush2.bf16.xpose.msra.mxu0 0
    %284 = vmatprep.subr.bf16.mxu0 0
    %285 = vmatpush2.bf16.xpose.msra.mxu0 0
    %286 = vmatprep.subr.bf16.mxu0 0
    %287 = vmatpush2.bf16.xpose.msra.mxu0 0
    %288 = vmatprep.subr.bf16.mxu0 0
    %289 = vmatpush2.bf16.xpose.msra.mxu0 0
    %290 = vmatprep.subr.bf16.mxu0 0
    %291 = vmatpush2.bf16.xpose.msra.mxu0 0
    %292 = vmatprep.mubr.bf16.mxu0 0
    %293 = vmatmul.mubr.bf16.gmra.mxu0 %v258
    %v294 = vpop.f32.mrf.mxu0
    %v295 = vadd.f32 0.0, %v294
    %v296 = vpop.f32.mrf.mxu0
    %v297 = vpop.f32.mrf.mxu0
    %v298 = vpop.f32.mrf.mxu0
    %299 = vdwg.mxu0
    %vm300 = vcmask 64512
    %v301 = vsel %vm300, %v252, -inf
    %302 = vmax.xlane.f32.xlu0 %v301
    %v303 = vpop.xlane.xlu0 %302
    %v304 = vsel %vm300, %v295, -inf
    %305 = vmax.xlane.f32.xlu0 %v304
    %v306 = vpop.xlane.xlu0 %305
    %v307 = vsub.f32 %v252, %v303
    %v308 = vsub.f32 %v295, %v306
    %v309 = vmul.f32 %v307, 1.442695
    %v310 = vpow.pop %v309
    %v311 = vmul.f32 %v308, 1.442695
    %v312 = vpow.pop %v311
    %v313 = vsel %vm300, %v310, 0.0
    %314 = vadd.xlane.f32.xlu0 %v313
    %v315 = vpop.xlane.xlu0 %314
    %v316 = vsel %vm300, %v312, 0.0
    %317 = vadd.xlane.f32.xlu0 %v316
    %v318 = vpop.xlane.xlu0 %317
    %v319 = vrcp.pop %v315
    %v320 = vrcp.pop %v318
    %v321 = vmul.f32 %v310, %v319
    %v322 = vmul.f32 %v312, %v320
    %v323 = vcombine.high %v321, 0.0
    %v325 = vunpack.c.l.s4 1983009808
    %v326 = vunpack.c.0.s8 %v325
    %v327 = vlaneseq
    %v328 = vshrl.u32 %v327, 7
    %v329 = vsub.s32 %v326, %v328
    %v330 = vrot.slane %v321, %v329
    %v332 = vunpack.c.l.s4 1983009808
    %v333 = vunpack.c.0.s8 %v332
    %v334 = vlaneseq
    %v335 = vshrl.u32 %v334, 7
    %v336 = vsub.s32 %v333, %v335
    %v337 = vrot.slane %v323, %v336
    %v338 = vcombine.high %v322, 0.0
    %v340 = vunpack.c.l.s4 1983009808
    %v341 = vunpack.c.0.s8 %v340
    %v342 = vlaneseq
    %v343 = vshrl.u32 %v342, 7
    %v344 = vsub.s32 %v341, %v343
    %v345 = vrot.slane %v322, %v344
    %v347 = vunpack.c.l.s4 1983009808
    %v348 = vunpack.c.0.s8 %v347
    %v349 = vlaneseq
    %v350 = vshrl.u32 %v349, 7
    %v351 = vsub.s32 %v348, %v350
    %v352 = vrot.slane %v338, %v351
    %v353 = vcombine.low %v330, %v345
    %v354 = vcombine.high %v330, %v345
    %v356 = vunpack.c.l.s4 1934713408
    %v357 = vunpack.c.0.s8 %v356
    %v358 = vlaneseq
    %v359 = vshrl.u32 %v358, 7
    %v360 = vsub.s32 %v357, %v359
    %v361 = vrot.slane %v353, %v360
    %v363 = vunpack.c.l.s4 1934713408
    %v364 = vunpack.c.0.s8 %v363
    %v365 = vlaneseq
    %v366 = vshrl.u32 %v365, 7
    %v367 = vsub.s32 %v364, %v366
    %v368 = vrot.slane %v354, %v367
    %v369 = vcombine.low %v337, %v352
    %v370 = vcombine.high %v337, %v352
    %v372 = vunpack.c.l.s4 1934713408
    %v373 = vunpack.c.0.s8 %v372
    %v374 = vlaneseq
    %v375 = vshrl.u32 %v374, 7
    %v376 = vsub.s32 %v373, %v375
    %v377 = vrot.slane %v369, %v376
    %v379 = vunpack.c.l.s4 1934713408
    %v380 = vunpack.c.0.s8 %v379
    %v381 = vlaneseq
    %v382 = vshrl.u32 %v381, 7
    %v383 = vsub.s32 %v380, %v382
    %v384 = vrot.slane %v370, %v383
    %v385 = vcombine.high %v361, 0.0
    %v386 = vcombine.high %v368, 0.0
    %v387 = vcombine.high %v377, 0.0
    %v388 = vcombine.high %v384, 0.0
    %v389 = vcombine.low %v361, %v368
    %v391 = vunpack.c.l.s4 1983009808
    %v392 = vunpack.c.0.s8 %v391
    %v393 = vlaneseq
    %v394 = vshrl.u32 %v393, 7
    %v395 = vsub.s32 %v392, %v394
    %v396 = vrot.slane %v389, %v395
    %v397 = vcombine.low %v385, %v386
    %v399 = vunpack.c.l.s4 1983009808
    %v400 = vunpack.c.0.s8 %v399
    %v401 = vlaneseq
    %v402 = vshrl.u32 %v401, 7
    %v403 = vsub.s32 %v400, %v402
    %v404 = vrot.slane %v397, %v403
    %v405 = vcombine.low %v377, %v384
    %v407 = vunpack.c.l.s4 1983009808
    %v408 = vunpack.c.0.s8 %v407
    %v409 = vlaneseq
    %v410 = vshrl.u32 %v409, 7
    %v411 = vsub.s32 %v408, %v410
    %v412 = vrot.slane %v405, %v411
    %v413 = vcombine.low %v387, %v388
    %v415 = vunpack.c.l.s4 1983009808
    %v416 = vunpack.c.0.s8 %v415
    %v417 = vlaneseq
    %v418 = vshrl.u32 %v417, 7
    %v419 = vsub.s32 %v416, %v418
    %v420 = vrot.slane %v413, %v419
    %v421 = vcombine.low %v396, %v404
    %v423 = vunpack.c.l.s4 1934713408
    %v424 = vunpack.c.0.s8 %v423
    %v425 = vlaneseq
    %v426 = vshrl.u32 %v425, 7
    %v427 = vsub.s32 %v424, %v426
    %v428 = vrot.slane %v421, %v427
    %v429 = vcombine.low %v412, %v420
    %v431 = vunpack.c.l.s4 1934713408
    %v432 = vunpack.c.0.s8 %v431
    %v433 = vlaneseq
    %v434 = vshrl.u32 %v433, 7
    %v435 = vsub.s32 %v432, %v434
    %v436 = vrot.slane %v429, %v435
    %v437 = vcombine.low %v428, %v436
    %v438 = vcombine.high %v428, %v436
    %440 = vrot.lane.b32.xlu0 %v438, 8
    %v441 = vpop.permute.xlu0 %440
    %v443 = vsel %vm300, %v437, %v441
    %vm444 = vcmask 130048
    %445 = vst.msk [vmem:[#allocation8] sm:$0xff] %vm444, %v443
    // Predicated region
    $region34: #{tpu_custom_call.1} parent=1 // pred_check
      _
    $region35: #{tpu_custom_call.1} parent=1 // pred_check_branch
      %447 = sbr.rel (0) target = $region37
    $region36: #{tpu_custom_call.1} parent=1 // pred_region
      %s449 = ssub.s32 128, 128
      %450 = vsyncadd [#allocation4], %s449
      %s452 = sshll.u32 [#allocation8], 4
      %s453 = int_to_ptr.vmem [resolvable:$true] %s452
      %455 = dma.vmem_to_hbm [thread:$0]  %s453, 128, %s5, [#allocation4]
    $region37: #{tpu_custom_call.1} parent=1 // pred_fallthru
      _
    // Predicated region
    $region38: #{tpu_custom_call.1} parent=1 // pred_check
      _
    $region39: #{tpu_custom_call.1} parent=1 // pred_check_branch
      %457 = sbr.rel (0) target = $region41
    $region40: #{tpu_custom_call.1} parent=1 // pred_region
      %458 = dma.done [#allocation4], 128
    $region41: #{tpu_custom_call.1} parent=1 // pred_fallthru
      _
    %459 = vsyncpa [#allocation3], 1
    %460 = vsyncpa [#allocation6], 1
    %461 = vsyncpa [#allocation4], 1

</llo_original>
